<compile_context>
chip_gen: v7x
topology: tpu7x:2x2x1
jax: 0.10.0
libtpu: 0.0.40
codegen_flags: <defaults>
</compile_context>

<pallas_src>
import functools

import jax
import jax.numpy as jnp
from jax.experimental import pallas as pl
from jax.experimental.pallas import tpu as pltpu

_LANE = 128


def _masked_nll_kernel(out_ref, tgt_ref, msk_ref, loss_ref, *,
                       tm, total_rows, steps_per_core):
    """Processes one (TM, D) tile of flattened log-probs.

    out_ref : (TM, D)   log-probabilities (kept in input dtype, not upcast)
    tgt_ref : (TM, 1)   int32 target class per row
    msk_ref : (TM, 1)   float mask per row
    loss_ref: (1, 1, 1) per-core resident partial-sum accumulator
    """
    g = pl.program_id(0)          # parallel axis (TensorCore split)
    i = pl.program_id(1)          # sequential reduction axis

    @pl.when(i == 0)
    def _():
        loss_ref[...] = jnp.zeros_like(loss_ref)

    logp = out_ref[...]                                  # (TM, D), input dtype
    tgt = tgt_ref[...]                                   # (TM, 1) int32
    msk = msk_ref[...].astype(jnp.float32)               # (TM, 1)

    # Row-validity predicate: the last tile may extend past M (cdiv grid), and
    # clamped dummy tiles lie entirely past M.  Garbage rows (possibly NaN)
    # must be gated with a select — mask*0 alone would let NaN through.
    block = g * steps_per_core + i
    row = block * tm + jax.lax.broadcasted_iota(jnp.int32, (tm, 1), dimension=0)
    valid = row < total_rows                             # (TM, 1) bool

    # NLL gather logp[r, tgt[r]] via one-hot compare-select (in input dtype:
    # each row sums exactly one non-zero term, so no precision is lost).
    col = jax.lax.broadcasted_iota(jnp.int32, logp.shape, dimension=1)
    onehot = jnp.where(col == tgt, logp, jnp.zeros_like(logp))
    picked = jnp.sum(onehot, axis=1, keepdims=True).astype(jnp.float32)  # (TM, 1)

    contrib = jnp.where(valid, -picked * msk, 0.0)
    loss_ref[...] = loss_ref[...] + jnp.sum(contrib)


def masked_nll_loss(outputs, targets, mask):
    """outputs: [B, N, D] log-probs; targets: [B, N] int; mask: [B, N].

    Returns mean over all B*N positions of (-outputs[b, n, targets[b, n]] * mask[b, n]).
    """
    B, N, D = outputs.shape
    M = B * N

    # 'b n d -> (b n) d' / 'b n -> (b n)': pure layout plumbing, done here.
    out2 = outputs.reshape(M, D)
    tgt2 = targets.reshape(M, 1).astype(jnp.int32)
    msk2 = mask.reshape(M, 1).astype(jnp.float32)

    # ---- Tile sizing: VMEM-budget driven, no wrapper-side padding ----------
    itemsize = jnp.dtype(outputs.dtype).itemsize
    sublane = max(8, 32 // max(1, itemsize))          # 8 (f32) / 16 (bf16) / 32 (i8)
    d_padded = pl.cdiv(D, _LANE) * _LANE              # lanes pad to 128
    # Live bytes per row: double-buffered (x2) logits tile + (tm,1) targets +
    # (tm,1) mask; each (tm,1) block occupies a full 128-lane stripe in VMEM.
    row_bytes = 2 * (d_padded * itemsize + _LANE * 4 + _LANE * 4)
    budget = 24 * 1024 * 1024                         # fits v7x's 64 MiB with headroom
    tm = max(sublane, (budget // row_bytes) // sublane * sublane)
    tm = min(tm, pl.cdiv(M, sublane) * sublane)       # never taller than all rows

    num_blocks = pl.cdiv(M, tm)
    n_cores = 2 if num_blocks > 1 else 1              # v7x has 2 TCs; neutral on v5e/v6e
    steps = pl.cdiv(num_blocks, n_cores)

    vmem_limit = max(32 * 1024 * 1024, tm * row_bytes + (2 << 20))
    # TODO(synk): for vocab-sized D (>=128K classes), tile the class axis or
    # DMA only the 128-lane chunk containing each row's target (scalar
    # prefetch) instead of streaming full rows — ~D/128x less HBM traffic.

    def row_map(g, i):
        # Clamp trailing dummy blocks to the last real block; their computed
        # rows are >= M so the validity predicate zeroes their contribution.
        return (jnp.minimum(g * steps + i, num_blocks - 1), 0)

    kernel = functools.partial(_masked_nll_kernel, tm=tm, total_rows=M,
                               steps_per_core=steps)

    partials = pl.pallas_call(
        kernel,
        out_shape=jax.ShapeDtypeStruct((n_cores, 1, 1), jnp.float32),
        grid_spec=pltpu.PrefetchScalarGridSpec(
            num_scalar_prefetch=0,
            grid=(n_cores, steps),
            in_specs=[
                pl.BlockSpec((tm, D), row_map),    # log-prob rows
                pl.BlockSpec((tm, 1), row_map),    # targets
                pl.BlockSpec((tm, 1), row_map),    # mask
            ],
            out_specs=pl.BlockSpec((1, 1, 1), lambda g, i: (g, 0, 0)),
        ),
        compiler_params=pltpu.CompilerParams(
            dimension_semantics=("parallel", "arbitrary"),
            vmem_limit_bytes=vmem_limit,
        ),
    )(out2, tgt2, msk2)

    # Mean over ALL B*N positions (matches th.mean(loss_flat * mask_flat)).
    return jnp.sum(partials) * (1.0 / float(M))


if __name__ == "__main__":
    # Small shapes consistent with the module: batch=2, seq=8, classes=32.
    B, N, D = 2, 8, 32

    key = jax.random.PRNGKey(0)
    k1, k2, k3 = jax.random.split(key, 3)

    logits = jax.random.normal(k1, (B, N, D), dtype=jnp.float32)
    outputs = jax.nn.log_softmax(logits, axis=-1)   # NLLLoss expects log-probs
    targets = jax.random.randint(k2, (B, N), 0, D, dtype=jnp.int32)
    mask = (jax.random.uniform(k3, (B, N)) > 0.3).astype(jnp.float32)

    loss = masked_nll_loss(outputs, targets, mask)
    loss = jax.block_until_ready(loss)

    # Pure-JAX reference of the PyTorch forward.
    picked = jnp.take_along_axis(outputs, targets[..., None], axis=-1)[..., 0]
    ref = jnp.mean((-picked) * mask)

    assert loss.shape == ()
    assert jnp.allclose(loss, ref, atol=1e-5, rtol=1e-5), (loss, ref)

    print("KERNEL_OK")
</pallas_src>

<mosaic_0001>
module attributes {stable_mosaic.version = 11 : i64} {
  func.func @_masked_nll_kernel(%arg0: i32, %arg1: i32, %arg2: memref<16x32xf32, #tpu.memory_space<vmem>>, %arg3: memref<16x1xi32, #tpu.memory_space<vmem>>, %arg4: memref<16x1xf32, #tpu.memory_space<vmem>>, %arg5: memref<1x1x1xf32, #tpu.memory_space<vmem>>) attributes {dimension_semantics = [#tpu.dimension_semantics<parallel>, #tpu.dimension_semantics<arbitrary>], iteration_bounds = array<i64: 1, 1>, scalar_prefetch = 0 : i64, scratch_operands = 0 : i64, tpu.core_type = #tpu.core_type<tc>, window_params = [{transform_indices = @transform_0, window_bounds = array<i64: 16, 32>}, {transform_indices = @transform_1, window_bounds = array<i64: 16, 1>}, {transform_indices = @transform_2, window_bounds = array<i64: 16, 1>}, {transform_indices = @transform_3, window_bounds = array<i64: 1, 1, 1>}]} {
    %c0_i32 = arith.constant 0 : i32
    %0 = arith.cmpi eq, %arg1, %c0_i32 : i32
    %1 = arith.extui %0 : i1 to i32
    %c0_i32_0 = arith.constant 0 : i32
    %2 = arith.cmpi ne, %1, %c0_i32_0 : i32
    scf.if %2 {
      %cst_17 = arith.constant 0.000000e+00 : f32
      %34 = vector.broadcast %cst_17 : f32 to vector<1x1x1xf32>
      %c0_18 = arith.constant 0 : index
      %c0_19 = arith.constant 0 : index
      %c0_20 = arith.constant 0 : index
      %35 = vector.load %arg5[%c0_18, %c0_19, %c0_20] : memref<1x1x1xf32, #tpu.memory_space<vmem>>, vector<1x1x1xf32>
      tpu.vector_store %arg5[%c0_18, %c0_19, %c0_20], %34 {strides = array<i32>} : memref<1x1x1xf32, #tpu.memory_space<vmem>>, vector<1x1x1xf32>,
    } else {
    }
    %c0 = arith.constant 0 : index
    %c0_1 = arith.constant 0 : index
    %3 = vector.load %arg2[%c0, %c0_1] : memref<16x32xf32, #tpu.memory_space<vmem>>, vector<16x32xf32>
    %c0_2 = arith.constant 0 : index
    %c0_3 = arith.constant 0 : index
    %4 = vector.load %arg3[%c0_2, %c0_3] : memref<16x1xi32, #tpu.memory_space<vmem>>, vector<16x1xi32>
    %c0_4 = arith.constant 0 : index
    %c0_5 = arith.constant 0 : index
    %5 = vector.load %arg4[%c0_4, %c0_5] : memref<16x1xf32, #tpu.memory_space<vmem>>, vector<16x1xf32>
    %c1_i32 = arith.constant 1 : i32
    %6 = arith.muli %arg0, %c1_i32 : i32
    %7 = arith.addi %6, %arg1 : i32
    %c16_i32 = arith.constant 16 : i32
    %8 = arith.muli %7, %c16_i32 : i32
    %9 = tpu.iota {dimensions = array<i32: 0>} : vector<16x1xi32>
    %10 = vector.broadcast %8 : i32 to vector<16x1xi32>
    %11 = arith.addi %10, %9 : vector<16x1xi32>
    %c16_i32_6 = arith.constant 16 : i32
    %12 = vector.broadcast %c16_i32_6 : i32 to vector<16x1xi32>
    %13 = arith.cmpi slt, %11, %12 : vector<16x1xi32>
    %14 = tpu.iota {dimensions = array<i32: 1>} : vector<16x32xi32>
    %15 = vector.broadcast %4 : vector<16x1xi32> to vector<16x32xi32>
    %16 = arith.cmpi eq, %14, %15 : vector<16x32xi32>
    %cst = arith.constant 0.000000e+00 : f32
    %17 = vector.broadcast %cst : f32 to vector<16x32xf32>
    %18 = arith.select %16, %3, %17 : vector<16x32xi1>, vector<16x32xf32>
    %cst_7 = arith.constant dense<0.000000e+00> : vector<16xf32>
    %19 = vector.multi_reduction <add>, %18, %cst_7 [1] : vector<16x32xf32> to vector<16xf32>
    %20 = vector.shape_cast %19 : vector<16xf32> to vector<16x1xf32>
    %cst_8 = arith.constant 0.000000e+00 : f32
    %21 = vector.broadcast %cst_8 : f32 to vector<16x1xf32>
    %22 = arith.subf %21, %20 : vector<16x1xf32>
    %23 = arith.mulf %22, %5 : vector<16x1xf32>
    %cst_9 = arith.constant 0.000000e+00 : f32
    %24 = vector.broadcast %cst_9 : f32 to vector<16x1xf32>
    %25 = arith.select %13, %23, %24 : vector<16x1xi1>, vector<16x1xf32>
    %c0_10 = arith.constant 0 : index
    %c0_11 = arith.constant 0 : index
    %c0_12 = arith.constant 0 : index
    %26 = vector.load %arg5[%c0_10, %c0_11, %c0_12] : memref<1x1x1xf32, #tpu.memory_space<vmem>>, vector<1x1x1xf32>
    %27 = vector.shape_cast %25 : vector<16x1xf32> to vector<1x16x1xf32>
    %cst_13 = arith.constant dense<0.000000e+00> : vector<1xf32>
    %28 = vector.multi_reduction <add>, %27, %cst_13 [1, 2] : vector<1x16x1xf32> to vector<1xf32>
    %29 = vector.shape_cast %28 : vector<1xf32> to vector<1x1x1xf32>
    %30 = vector.extract %29[0, 0, 0] : f32 from vector<1x1x1xf32>
    %31 = vector.broadcast %30 : f32 to vector<1x1x1xf32>
    %32 = arith.addf %26, %31 : vector<1x1x1xf32>
    %c0_14 = arith.constant 0 : index
    %c0_15 = arith.constant 0 : index
    %c0_16 = arith.constant 0 : index
    %33 = vector.load %arg5[%c0_14, %c0_15, %c0_16] : memref<1x1x1xf32, #tpu.memory_space<vmem>>, vector<1x1x1xf32>
    tpu.vector_store %arg5[%c0_14, %c0_15, %c0_16], %32 {strides = array<i32>} : memref<1x1x1xf32, #tpu.memory_space<vmem>>, vector<1x1x1xf32>,
    return
  }
  func.func @transform_0(%arg0: i32, %arg1: i32) -> (i32, i32) {
    %c1_i32 = arith.constant 1 : i32
    %0 = arith.muli %arg0, %c1_i32 : i32
    %1 = arith.addi %0, %arg1 : i32
    %c0_i32 = arith.constant 0 : i32
    %2 = arith.minsi %1, %c0_i32 : i32
    %c0_i32_0 = arith.constant 0 : i32
    %c0_i32_1 = arith.constant 0 : i32
    return %2, %c0_i32_0 : i32, i32
  }
  func.func @transform_1(%arg0: i32, %arg1: i32) -> (i32, i32) {
    %c1_i32 = arith.constant 1 : i32
    %0 = arith.muli %arg0, %c1_i32 : i32
    %1 = arith.addi %0, %arg1 : i32
    %c0_i32 = arith.constant 0 : i32
    %2 = arith.minsi %1, %c0_i32 : i32
    %c0_i32_0 = arith.constant 0 : i32
    %c0_i32_1 = arith.constant 0 : i32
    return %2, %c0_i32_0 : i32, i32
  }
  func.func @transform_2(%arg0: i32, %arg1: i32) -> (i32, i32) {
    %c1_i32 = arith.constant 1 : i32
    %0 = arith.muli %arg0, %c1_i32 : i32
    %1 = arith.addi %0, %arg1 : i32
    %c0_i32 = arith.constant 0 : i32
    %2 = arith.minsi %1, %c0_i32 : i32
    %c0_i32_0 = arith.constant 0 : i32
    %c0_i32_1 = arith.constant 0 : i32
    return %2, %c0_i32_0 : i32, i32
  }
  func.func @transform_3(%arg0: i32, %arg1: i32) -> (i32, i32, i32) {
    %c0_i32 = arith.constant 0 : i32
    %c0_i32_0 = arith.constant 0 : i32
    %c0_i32_1 = arith.constant 0 : i32
    return %arg0, %c0_i32, %c0_i32_0 : i32, i32, i32
  }
}

</mosaic_0001>

<llo_original>
// kernel: tpu_custom_call.1
$region0: #{tpu_custom_call.1}
  #allocation0 [shape = 'u32[]', space=smem, size = 0x4, offset = 0x4, fixed_abs, tag = 'smem constant byte address 0x4 - core index']
  #allocation1 [shape = 'u32[144,128]{1,0:T(1,128)}', space=vmem, size = 0x12000, scoped, tag = 'internal scratch']
  %s0 = inlined_call_operand.vmem [shape: f32[16,32], index: 0, kind: input, shape index: {}]
  %s1 = inlined_call_operand.vmem [shape: s32[16,1], index: 1, kind: input, shape index: {}]
  %s2 = inlined_call_operand.vmem [shape: f32[16,1], index: 2, kind: input, shape index: {}]
  %s3 = inlined_call_operand.hbm [shape: f32[1,1,1], index: 3, kind: output, shape index: {}]
  %s4 = sld [smem:[#allocation0]]
  $region26: #{tpu_custom_call.1} parent=0
    _
  %s6 = ssub.s32 1, %s4
  %s7 = scalar_select 0, %s6, %s4
  $region1: #{tpu_custom_call.1} parent=0
    #allocation2 [shape = 'u8[512]{0}', space=vmem, size = 0x400, scoped, tag = 'output window, operand 0, single buffered']
    #allocation3 [shape = 's32[1]{0}', space=sflag, size = 0x4, scoped, tag = 'scoped memory for tpu_custom_call.1']
    %8 = vsyncpa [#allocation3], 0
    // Predicated region
    $region2: #{tpu_custom_call.1} parent=1 // pred_check
      _
    $region3: #{tpu_custom_call.1} parent=1 // pred_check_branch
      %10 = sbr.rel (0) target = $region5
    $region4: #{tpu_custom_call.1} parent=1 // pred_region
      %s11 = sadd.s32 0, 0
      %p12 = scmp.lt.s32.totalorder %s11, 0
      %s13 = scalar_select %p12, %s11, 0
      %s14 = smul.u32 2, %s13
      %p15 = scmp.lt.s32.totalorder %s14, 1
      %s16 = scalar_select %p15, %s14, 1
      %s17 = smul.addr %s16, 8
      %s18 = scalar_lea.vmem %s0, %s17
      %s19 = sadd.s32 0, 0
      %p20 = scmp.lt.s32.totalorder %s19, 0
      %s21 = scalar_select %p20, %s19, 0
      %s22 = smul.u32 2, %s21
    $region5: #{tpu_custom_call.1} parent=1 // pred_fallthru
      _
    // Predicated region
    $region6: #{tpu_custom_call.1} parent=1 // pred_check
      _
    $region7: #{tpu_custom_call.1} parent=1 // pred_check_branch
      %24 = sbr.rel (0) target = $region9
    $region8: #{tpu_custom_call.1} parent=1 // pred_region
      %s25 = sadd.s32 0, 0
      %p26 = scmp.lt.s32.totalorder %s25, 0
      %s27 = scalar_select %p26, %s25, 0
      %s28 = smul.u32 2, %s27
      %p29 = scmp.lt.s32.totalorder %s28, 1
      %s30 = scalar_select %p29, %s28, 1
      %s31 = smul.addr %s30, 8
      %s32 = scalar_lea.vmem %s1, %s31
      %s33 = sadd.s32 0, 0
      %p34 = scmp.lt.s32.totalorder %s33, 0
      %s35 = scalar_select %p34, %s33, 0
      %s36 = smul.u32 2, %s35
    $region9: #{tpu_custom_call.1} parent=1 // pred_fallthru
      _
    // Predicated region
    $region10: #{tpu_custom_call.1} parent=1 // pred_check
      _
    $region11: #{tpu_custom_call.1} parent=1 // pred_check_branch
      %38 = sbr.rel (0) target = $region13
    $region12: #{tpu_custom_call.1} parent=1 // pred_region
      %s39 = sadd.s32 0, 0
      %p40 = scmp.lt.s32.totalorder %s39, 0
      %s41 = scalar_select %p40, %s39, 0
      %s42 = smul.u32 2, %s41
      %p43 = scmp.lt.s32.totalorder %s42, 1
      %s44 = scalar_select %p43, %s42, 1
      %s45 = smul.addr %s44, 8
      %s46 = scalar_lea.vmem %s2, %s45
      %s47 = sadd.s32 0, 0
      %p48 = scmp.lt.s32.totalorder %s47, 0
      %s49 = scalar_select %p48, %s47, 0
      %s50 = smul.u32 2, %s49
    $region13: #{tpu_custom_call.1} parent=1 // pred_fallthru
      _
    %s51 = sadd.s32 0, 0
    %p52 = scmp.lt.s32.totalorder %s51, 0
    %s53 = scalar_select %p52, %s51, 0
    %s54 = smul.u32 2, %s53
    %p55 = scmp.lt.s32.totalorder %s54, 1
    %s56 = scalar_select %p55, %s54, 1
    %s57 = smul.addr %s56, 8
    %s58 = scalar_lea.vmem %s0, %s57
    %s59 = sadd.s32 0, 0
    %p60 = scmp.lt.s32.totalorder %s59, 0
    %s61 = scalar_select %p60, %s59, 0
    %s62 = smul.u32 2, %s61
    %p63 = scmp.lt.s32.totalorder %s62, 1
    %s64 = scalar_select %p63, %s62, 1
    %s65 = smul.addr %s64, 8
    %s66 = scalar_lea.vmem %s1, %s65
    %s67 = sadd.s32 0, 0
    %p68 = scmp.lt.s32.totalorder %s67, 0
    %s69 = scalar_select %p68, %s67, 0
    %s70 = smul.u32 2, %s69
    %p71 = scmp.lt.s32.totalorder %s70, 1
    %s72 = scalar_select %p71, %s70, 1
    %s73 = smul.addr %s72, 8
    %s74 = scalar_lea.vmem %s2, %s73
    %s75 = sadd.s32 0, 0
    %p76 = scmp.lt.s32.totalorder %s75, 0
    %s77 = scalar_select %p76, %s75, 0
    %s78 = smul.u32 2, %s77
    %p79 = scmp.lt.s32.totalorder %s78, 1
    %s80 = scalar_select %p79, %s78, 1
    %s81 = smul.addr %s80, 8
    %s82 = scalar_lea.vmem %s0, %s81
    %s83 = sadd.s32 0, 0
    %p84 = scmp.lt.s32.totalorder %s83, 0
    %s85 = scalar_select %p84, %s83, 0
    %s86 = smul.u32 2, %s85
    %s87 = sadd.s32 0, 0
    %p88 = scmp.lt.s32.totalorder %s87, 0
    %s89 = scalar_select %p88, %s87, 0
    %s90 = smul.u32 2, %s89
    %p91 = scmp.lt.s32.totalorder %s90, 1
    %s92 = scalar_select %p91, %s90, 1
    %s93 = smul.addr %s92, 8
    %s94 = scalar_lea.vmem %s1, %s93
    %s95 = sadd.s32 0, 0
    %p96 = scmp.lt.s32.totalorder %s95, 0
    %s97 = scalar_select %p96, %s95, 0
    %s98 = smul.u32 2, %s97
    %s99 = sadd.s32 0, 0
    %p100 = scmp.lt.s32.totalorder %s99, 0
    %s101 = scalar_select %p100, %s99, 0
    %s102 = smul.u32 2, %s101
    %p103 = scmp.lt.s32.totalorder %s102, 1
    %s104 = scalar_select %p103, %s102, 1
    %s105 = smul.addr %s104, 8
    %s106 = scalar_lea.vmem %s2, %s105
    %s107 = sadd.s32 0, 0
    %p108 = scmp.lt.s32.totalorder %s107, 0
    %s109 = scalar_select %p108, %s107, 0
    %s110 = smul.u32 2, %s109
    %p111 = scmp.eq.s32.totalorder 0, 0
    // Predicated region
    $region14: #{tpu_custom_call.1} parent=1 // pred_check
      %p112 = pneg %p111
    $region15: #{tpu_custom_call.1} parent=1 // pred_check_branch
      %114 = sbr.rel (%p112) target = $region17
    $region16: #{tpu_custom_call.1} parent=1 // pred_region
      %vm115 = vcmask 0
      %116 = vst.msk [vmem:[#allocation2] sm:$0x1] %vm115, 0.0
    $region17: #{tpu_custom_call.1} parent=1 // pred_fallthru
      _
    %v117 = vld [vmem:[%s82] sm:$0xff]
    %v118 = vld [vmem:[%s82 + $0x8] sm:$0xff]
    %v119 = vld [vmem:[%s94] sm:$0xff]
    %v120 = vld [vmem:[%s94 + $0x8] sm:$0xff]
    %v121 = vld [vmem:[%s106] sm:$0xff]
    %v122 = vld [vmem:[%s106 + $0x8] sm:$0xff]
    %s123 = sadd.s32 0, 0
    %s124 = smul.u32 %s123, 16
    %v125 = vlaneseq
    %v126 = vshrl.u32 %v125, 7
    %v127 = vadd.s32 %v126, 8
    %v128 = vstv %s124
    %v129 = vadd.s32 %v128, %v126
    %v130 = vadd.s32 %v128, %v127
    %vm131 = vcmp.lt.s32.totalorder %v129, 16
    %vm132 = vcmp.lt.s32.totalorder %v130, 16
    %v133 = vlaneseq
    %v134 = vand.u32 %v133, 127
    %135 = vset.pattern.permute.xlu0 0
    %136 = vperm.xlu0 %135, %v119
    %v137 = vpop.permute.xlu0 %136
    %138 = vset.pattern.permute.xlu0 0
    %139 = vperm.xlu0 %138, %v120
    %v140 = vpop.permute.xlu0 %139
    %vm141 = vcmp.eq.s32.totalorder %v134, %v137
    %vm142 = vcmp.eq.s32.totalorder %v134, %v140
    %v143 = vsel %vm141, %v117, 0.0
    %v144 = vsel %vm142, %v118, 0.0
    %vm145 = vcmask 261120
    %v146 = vsel %vm145, %v143, 0.0
    %147 = vadd.xlane.f32.xlu0 %v146
    %v148 = vpop.xlane.xlu0 %147
    %v149 = vsel %vm145, %v144, 0.0
    %150 = vadd.xlane.f32.xlu0 %v149
    %v151 = vpop.xlane.xlu0 %150
    %v152 = vsub.f32 0.0, %v148
    %v153 = vsub.f32 0.0, %v151
    %v154 = vmul.f32 %v152, %v121
    %v155 = vmul.f32 %v153, %v122
    %v156 = vsel %vm131, %v154, 0.0
    %v157 = vsel %vm132, %v155, 0.0
    %v158 = vld [vmem:[#allocation2] sm:$0x1]
    %vm159 = vcmask 7168
    %v160 = vsel %vm159, %v156, 0.0
    %v161 = vsel %vm159, %v157, 0.0
    %v162 = vadd.f32 %v160, %v161
    %163 = vadd.xlane.f32.xlu0 %v162
    %v164 = vpop.xlane.xlu0 %163
    %v165 = vrot.slane %v164, 4
    %v166 = vadd.f32 %v164, %v165
    %v167 = vrot.slane %v166, 2
    %v168 = vadd.f32 %v166, %v167
    %v169 = vrot.slane %v168, 1
    %v170 = vadd.f32 %v168, %v169
    %s171 = vtos %v170
    %v172 = vstv %s171
    %v173 = vadd.f32 %v158, %v172
    %vm174 = vcmask 0
    %175 = vst.msk [vmem:[#allocation2] sm:$0x1] %vm174, %v173
    // Predicated region
    $region18: #{tpu_custom_call.1} parent=1 // pred_check
      _
    $region19: #{tpu_custom_call.1} parent=1 // pred_check_branch
      %177 = sbr.rel (0) target = $region21
    $region20: #{tpu_custom_call.1} parent=1 // pred_region
      %s179 = ssub.s32 16, 16
      %180 = vsyncadd [#allocation3], %s179
      %s182 = sshll.u32 [#allocation2], 4
      %s183 = int_to_ptr.vmem [resolvable:$true] %s182
      %185 = dma.vmem_to_hbm [thread:$0]  %s183, 16, %s3, [#allocation3]
    $region21: #{tpu_custom_call.1} parent=1 // pred_fallthru
      _
    // Predicated region
    $region22: #{tpu_custom_call.1} parent=1 // pred_check
      _
    $region23: #{tpu_custom_call.1} parent=1 // pred_check_branch
      %187 = sbr.rel (0) target = $region25
    $region24: #{tpu_custom_call.1} parent=1 // pred_region
      %188 = dma.done [#allocation3], 16
    $region25: #{tpu_custom_call.1} parent=1 // pred_fallthru
      _
    %189 = vsyncpa [#allocation3], 1

</llo_original>
